<compile_context>
chip_gen: v5e
topology: v5e:2x2
jax: 0.10.0
libtpu: 0.0.40
codegen_flags: <defaults>
</compile_context>

<pallas_src>
import functools
import math

import jax
import jax.numpy as jnp
from jax.experimental import pallas as pl
from jax.experimental.pallas import tpu as pltpu


def _ceil_div(a, b):
    return -(-a // b)


# ----------------------------- YaRN helpers (glue, plain Python/JAX) ---------

def _yarn_find_correction_dim(num_rotations, dim, base=10000,
                              max_position_embeddings=2048):
    return dim * math.log(max_position_embeddings /
                          (num_rotations * 2 * math.pi)) / (2 * math.log(base))


def _yarn_find_correction_range(low_rot, high_rot, dim, base=10000,
                                max_position_embeddings=2048):
    low = math.floor(
        _yarn_find_correction_dim(low_rot, dim, base, max_position_embeddings))
    high = math.ceil(
        _yarn_find_correction_dim(high_rot, dim, base, max_position_embeddings))
    return max(low, 0), min(high, dim - 1)


def _yarn_get_mscale(scale=1.0):
    if scale <= 1:
        return 1.0
    return 0.1 * math.log(scale) + 1.0


def _yarn_linear_ramp_mask(lo, hi, n):
    if lo == hi:
        hi += 0.001
    linear = (jnp.arange(n, dtype=jnp.float32) - lo) / (hi - lo)
    return jnp.clip(linear, 0.0, 1.0)


# ----------------------------- Pallas kernel ---------------------------------

def _yarn_cos_sin_kernel(pos_ref, inv_ref, cos_ref, sin_ref, *,
                         fold, mscale, halve):
    """Build one (tile_rows, width) tile of the cos/sin tables.

    pos_ref : (tile_rows, cw) fp32, VMEM-resident in-tile positions
              pos[r, c] = r*fold + lane_position_offset(c)
    inv_ref : (1, cw)         fp32, inverse-frequency row (layout-matched)
    cos_ref / sin_ref: (tile_rows, width) output tiles (target dtype)
      halve=False : cw == width (dim, or fold*dim lane-dense folded slab)
      halve=True  : cw == dim//2, width == dim (two aligned slice-stores)
    """
    rows = cos_ref.shape[0]
    base = (pl.program_id(0) * (rows * fold)).astype(jnp.float32)
    t = pos_ref[...] + base                 # absolute positions (fp32)
    freqs = t * inv_ref[...]                # matches outer(t, inv_freq) rounding
    c = jnp.cos(freqs)
    s = jnp.sin(freqs)
    if mscale != 1.0:
        c = c * mscale
        s = s * mscale
    if halve:
        # cos(emb)[:, :half] == cos(emb)[:, half:] -> compute once, store twice.
        half = freqs.shape[-1]
        cc = c.astype(cos_ref.dtype)
        ss = s.astype(sin_ref.dtype)
        cos_ref[:, :half] = cc
        cos_ref[:, half:] = cc
        sin_ref[:, :half] = ss
        sin_ref[:, half:] = ss
    else:
        cos_ref[...] = c.astype(cos_ref.dtype)
        sin_ref[...] = s.astype(sin_ref.dtype)


def _sublane_multiple(dtype):
    itemsize = jnp.dtype(dtype).itemsize
    return max(8, 32 // max(itemsize, 1))     # 8 (fp32), 16 (bf16/fp16), 32 (8b)


def _choose_fold(dim):
    """positions folded per slab row so the stored last dim is lane-dense."""
    fold = 128 // math.gcd(dim, 128)
    if fold * dim > 1024:     # unusual dims: fall back to no folding
        fold = 1
    return fold


# Working-set budget per grid step (outputs double-buffered + resident position
# table + f32 elementwise intermediates).  Kept well under the explicit
# vmem_limit_bytes below and under v7x's 64 MiB physical VMEM.
_VMEM_TILE_BUDGET = 20 * 1024 * 1024
_VMEM_LIMIT_BYTES = 32 * 1024 * 1024


@functools.partial(jax.jit, static_argnames=("seqlen", "mscale", "out_dtype"))
def _yarn_cos_sin_pallas(inv_freq, seqlen, mscale, out_dtype):
    """inv_freq: (dim//2,) fp32. Returns (cos, sin), each (seqlen, dim)."""
    half = int(inv_freq.shape[0])
    dim = 2 * half
    halve = (dim % 256 == 0)   # half is a multiple of 128 -> true 2x EUP saving

    if halve:
        fold = 1
        cw = half
        width = dim
        inv_row = inv_freq.astype(jnp.float32).reshape(1, cw)
    else:
        fold = _choose_fold(dim)
        cw = fold * dim
        width = cw
        inv_dup = jnp.concatenate([inv_freq, inv_freq]).astype(jnp.float32)
        inv_row = jnp.tile(inv_dup, fold).reshape(1, cw)
        # TODO(synk): dim=128 could halve EUP work via an XLU lane-duplicate
        # (pltpu.roll-based) of a 64-lane half; not implemented here.

    rows_total = _ceil_div(seqlen, fold)            # rows of the (folded) slab
    sub = _sublane_multiple(out_dtype)
    itemsize = jnp.dtype(out_dtype).itemsize

    # VMEM-budgeted tile: 2 outputs x 2 buffers + position table (2 buffers,
    # fetched once since its block index is constant) + ~4 f32 intermediates.
    bytes_per_row = 4 * width * itemsize + 8 * cw + 16 * cw
    max_tile_rows = max(sub, (_VMEM_TILE_BUDGET // bytes_per_row) // sub * sub)

    n_steps = max(1, _ceil_div(rows_total, max_tile_rows))
    if n_steps == 1 and rows_total >= 2 * sub:
        n_steps = 2          # >=2 grid steps so v7x megacore splits the build
    if n_steps > 1:
        tile_rows = _ceil_div(_ceil_div(rows_total, n_steps), sub) * sub
    else:
        tile_rows = rows_total          # single block == full array dims
    grid = _ceil_div(rows_total, tile_rows)

    # In-tile position table (fp32, exact integers), resident across the grid.
    row = jnp.arange(tile_rows, dtype=jnp.float32).reshape(tile_rows, 1) * fold
    if fold > 1:
        poff = jnp.repeat(jnp.arange(fold, dtype=jnp.float32), dim).reshape(1, cw)
        pos = row + poff
    else:
        pos = jnp.broadcast_to(row, (tile_rows, cw))

    kernel = functools.partial(_yarn_cos_sin_kernel, fold=fold,
                               mscale=float(mscale), halve=halve)
    n_transc = 2 * rows_total * cw
    cost = pl.CostEstimate(
        flops=int(4 * rows_total * cw),
        transcendentals=int(n_transc),
        bytes_accessed=int(2 * rows_total * width * itemsize
                           + tile_rows * cw * 4 + cw * 4),
    )

    cos_slab, sin_slab = pl.pallas_call(
        kernel,
        grid=(grid,),
        out_shape=(
            jax.ShapeDtypeStruct((rows_total, width), out_dtype),
            jax.ShapeDtypeStruct((rows_total, width), out_dtype),
        ),
        in_specs=[
            pl.BlockSpec((tile_rows, cw), lambda i: (0, 0)),   # pos (resident)
            pl.BlockSpec((1, cw), lambda i: (0, 0)),           # inv (resident)
        ],
        out_specs=(
            pl.BlockSpec((tile_rows, width), lambda i: (i, 0)),
            pl.BlockSpec((tile_rows, width), lambda i: (i, 0)),
        ),
        compiler_params=pltpu.CompilerParams(
            dimension_semantics=("parallel",),       # megacore split (v7x)
            vmem_limit_bytes=_VMEM_LIMIT_BYTES),
        cost_estimate=cost,
    )(pos, inv_row)

    if fold == 1:
        return cos_slab, sin_slab
    # contiguous (free) reshape back to (positions, dim); slice only when the
    # sequence length is not a multiple of the fold (avoids the copy otherwise).
    cos = cos_slab.reshape(rows_total * fold, dim)
    sin = sin_slab.reshape(rows_total * fold, dim)
    if rows_total * fold != seqlen:
        cos = cos[:seqlen]
        sin = sin[:seqlen]
    return cos, sin


# ----------------------------- Module port -----------------------------------

class FlashYaRNRotaryEmbedding:
    """JAX/Pallas port of the PyTorch FlashYaRNRotaryEmbedding."""

    def __init__(self, dim, base=10000.0, interleaved=False, scaling_factor=1.0,
                 pos_idx_in_fp32=True, max_position_embeddings=2048,
                 original_max_position_embeddings=2048, extrapolation_factor=1,
                 attn_factor=1, beta_fast=32, beta_slow=1, dynamic=False,
                 finetuned=False):
        assert dim % 2 == 0
        self.dim = dim
        self.base = float(base)
        self.interleaved = interleaved
        self.scaling_factor = scaling_factor
        self.max_position_embeddings = max_position_embeddings
        self.original_max_position_embeddings = (
            original_max_position_embeddings
            if original_max_position_embeddings else max_position_embeddings)
        self.extrapolation_factor = extrapolation_factor
        self.attn_factor = attn_factor
        self.beta_fast = beta_fast
        self.beta_slow = beta_slow
        self.pos_idx_in_fp32 = pos_idx_in_fp32
        self.mscale = float(_yarn_get_mscale(self.scaling_factor) * attn_factor)
        self.dynamic = dynamic
        self.finetuned = finetuned
        if not dynamic:
            self.inv_freq = self._compute_inv_freq(scaling_factor)
        self._seq_len_cached = 0
        self._cos_cached = None
        self._sin_cached = None

    def _compute_inv_freq(self, scaling_factor):
        pos_freqs = self.base ** (
            jnp.arange(0, self.dim, 2, dtype=jnp.float32) / self.dim)
        inv_freq_extrapolation = 1.0 / pos_freqs
        inv_freq_interpolation = 1.0 / (scaling_factor * pos_freqs)
        low, high = _yarn_find_correction_range(
            self.beta_fast, self.beta_slow, self.dim, self.base,
            self.original_max_position_embeddings)
        inv_freq_mask = (1.0 - _yarn_linear_ramp_mask(low, high, self.dim // 2)
                         ) * self.extrapolation_factor
        inv_freq = (inv_freq_interpolation * (1 - inv_freq_mask)
                    + inv_freq_extrapolation * inv_freq_mask)
        return inv_freq.astype(jnp.float32)

    def _compute_inv_freq_original(self):
        return (1.0 / self.base ** (
            jnp.arange(0, self.dim, 2, dtype=jnp.float32) / self.dim)
                ).astype(jnp.float32)

    def _update_cos_sin_cache(self, seqlen, dtype):
        # Rebuild only when the cache is too short or dtype changed (mirrors
        # the PyTorch module's caching behavior; steady-state forward = hit).
        if (self._cos_cached is None or seqlen > self._seq_len_cached
                or self._cos_cached.dtype != dtype):
            self._seq_len_cached = seqlen
            if self.dynamic:
                scaling_factor = None
                if seqlen <= self.max_position_embeddings:
                    if self.finetuned:
                        scaling_factor = self.scaling_factor
                else:
                    scaling_factor = seqlen / self.original_max_position_embeddings
                if scaling_factor:
                    self.inv_freq = self._compute_inv_freq(scaling_factor)
                    self.mscale = float(
                        _yarn_get_mscale(scaling_factor) * self.attn_factor)
                else:
                    self.inv_freq = self._compute_inv_freq_original()
            # TODO(synk): pos_idx_in_fp32=False with a sub-fp32 inv_freq buffer
            # is not modeled; inv_freq here is always fp32 so positions are
            # generated in fp32 inside the kernel (matches the default path).
            self._cos_cached, self._sin_cached = _yarn_cos_sin_pallas(
                self.inv_freq, int(seqlen), self.mscale, dtype)

    def __call__(self, q, seqlen_offset: int = 0):
        # Reference uses q.shape[2] + seqlen_offset (the nheads axis of the
        # documented (b, s, h, d) layout) — reproduced exactly.
        self._update_cos_sin_cache(q.shape[2] + seqlen_offset, q.dtype)
        return self._cos_cached, self._sin_cached


# ----------------------------- Test / demo -----------------------------------

def _reference_cos_sin(inv_freq, seqlen, mscale, out_dtype):
    t = jnp.arange(seqlen, dtype=jnp.float32)
    freqs = jnp.outer(t, inv_freq)
    emb = jnp.concatenate([freqs, freqs], axis=-1)
    return ((jnp.cos(emb) * mscale).astype(out_dtype),
            (jnp.sin(emb) * mscale).astype(out_dtype))


if __name__ == "__main__":
    key = jax.random.PRNGKey(0)

    # --- check 1: demo shape, fp32, dim=32 (lane-dense folded path, fold=4) ---
    batch, seqlen, nheads, headdim = 2, 8, 16, 32
    q = jax.random.normal(key, (batch, seqlen, nheads, headdim),
                          dtype=jnp.float32)
    rope = FlashYaRNRotaryEmbedding(dim=headdim, scaling_factor=2.0,
                                    original_max_position_embeddings=2048)
    cos, sin = rope(q, seqlen_offset=0)
    jax.block_until_ready((cos, sin))
    n = q.shape[2]
    cos_ref, sin_ref = _reference_cos_sin(rope.inv_freq, n, rope.mscale, q.dtype)
    assert cos.shape == (n, headdim) and sin.shape == (n, headdim)
    assert cos.dtype == q.dtype and sin.dtype == q.dtype
    assert jnp.allclose(cos, cos_ref, atol=1e-4, rtol=1e-4)
    assert jnp.allclose(sin, sin_ref, atol=1e-4, rtol=1e-4)

    # cache hit: same tables returned, no rebuild / no kernel launch
    cos2, sin2 = rope(q, seqlen_offset=0)
    assert cos2 is cos and sin2 is sin

    # --- check 2: multi-tile grid + seqlen_offset, fp32, dim=64 (fold=2) ------
    q2 = jax.random.normal(key, (1, 4, 16, 64), dtype=jnp.float32)
    rope2 = FlashYaRNRotaryEmbedding(dim=64, scaling_factor=4.0,
                                     original_max_position_embeddings=2048)
    off = 2288
    cos, sin = rope2(q2, seqlen_offset=off)
    jax.block_until_ready((cos, sin))
    n2 = q2.shape[2] + off
    cos_ref, sin_ref = _reference_cos_sin(rope2.inv_freq, n2, rope2.mscale,
                                          q2.dtype)
    assert cos.shape == (n2, 64) and sin.shape == (n2, 64)
    assert jnp.allclose(cos, cos_ref, atol=5e-3, rtol=0)
    assert jnp.allclose(sin, sin_ref, atol=5e-3, rtol=0)

    # --- check 3: halved-transcendental path (dim % 256 == 0), bf16 output,
    # --- ragged last block (rows_total=40, tile=32) -----------------------------
    q3 = jax.random.normal(key, (1, 4, 40, 256), dtype=jnp.bfloat16)
    rope3 = FlashYaRNRotaryEmbedding(dim=256, scaling_factor=1.0,
                                     original_max_position_embeddings=2048)
    cos, sin = rope3(q3, seqlen_offset=0)
    jax.block_until_ready((cos, sin))
    n3 = q3.shape[2]
    cos_ref, sin_ref = _reference_cos_sin(rope3.inv_freq, n3, rope3.mscale,
                                          jnp.bfloat16)
    assert cos.shape == (n3, 256) and cos.dtype == jnp.bfloat16
    assert jnp.allclose(cos.astype(jnp.float32), cos_ref.astype(jnp.float32),
                        atol=2e-2, rtol=0)
    assert jnp.allclose(sin.astype(jnp.float32), sin_ref.astype(jnp.float32),
                        atol=2e-2, rtol=0)

    print("KERNEL_OK")
</pallas_src>

<mosaic_0001>
module attributes {stable_mosaic.version = 11 : i64} {
  func.func @_yarn_cos_sin_kernel(%arg0: i32, %arg1: memref<4x128xf32, #tpu.memory_space<vmem>>, %arg2: memref<1x128xf32, #tpu.memory_space<vmem>>, %arg3: memref<4x128xf32, #tpu.memory_space<vmem>>, %arg4: memref<4x128xf32, #tpu.memory_space<vmem>>) attributes {dimension_semantics = [#tpu.dimension_semantics<parallel>], iteration_bounds = array<i64: 1>, scalar_prefetch = 0 : i64, scratch_operands = 0 : i64, tpu.core_type = #tpu.core_type<tc>, window_params = [{pipeline_mode = #tpu.pipeline_mode<synchronous>, transform_indices = @transform_0, window_bounds = array<i64: 4, 128>}, {pipeline_mode = #tpu.pipeline_mode<synchronous>, transform_indices = @transform_1, window_bounds = array<i64: 1, 128>}, {transform_indices = @transform_2, window_bounds = array<i64: 4, 128>}, {transform_indices = @transform_3, window_bounds = array<i64: 4, 128>}]} {
    %c16_i32 = arith.constant 16 : i32
    %0 = arith.muli %arg0, %c16_i32 : i32
    %1 = arith.sitofp %0 : i32 to f32
    %c0 = arith.constant 0 : index
    %c0_0 = arith.constant 0 : index
    %2 = vector.load %arg1[%c0, %c0_0] : memref<4x128xf32, #tpu.memory_space<vmem>>, vector<4x128xf32>
    %3 = vector.broadcast %1 : f32 to vector<4x128xf32>
    %4 = arith.addf %2, %3 : vector<4x128xf32>
    %c0_1 = arith.constant 0 : index
    %c0_2 = arith.constant 0 : index
    %5 = vector.load %arg2[%c0_1, %c0_2] : memref<1x128xf32, #tpu.memory_space<vmem>>, vector<1x128xf32>
    %6 = vector.broadcast %5 : vector<1x128xf32> to vector<4x128xf32>
    %7 = arith.mulf %4, %6 : vector<4x128xf32>
    %8 = math.cos %7 : vector<4x128xf32>
    %9 = math.sin %7 : vector<4x128xf32>
    %cst = arith.constant 1.06931472 : f32
    %10 = vector.broadcast %cst : f32 to vector<4x128xf32>
    %11 = arith.mulf %8, %10 : vector<4x128xf32>
    %cst_3 = arith.constant 1.06931472 : f32
    %12 = vector.broadcast %cst_3 : f32 to vector<4x128xf32>
    %13 = arith.mulf %9, %12 : vector<4x128xf32>
    %c0_4 = arith.constant 0 : index
    %c0_5 = arith.constant 0 : index
    %14 = vector.load %arg3[%c0_4, %c0_5] : memref<4x128xf32, #tpu.memory_space<vmem>>, vector<4x128xf32>
    tpu.vector_store %arg3[%c0_4, %c0_5], %11 {strides = array<i32>} : memref<4x128xf32, #tpu.memory_space<vmem>>, vector<4x128xf32>,
    %c0_6 = arith.constant 0 : index
    %c0_7 = arith.constant 0 : index
    %15 = vector.load %arg4[%c0_6, %c0_7] : memref<4x128xf32, #tpu.memory_space<vmem>>, vector<4x128xf32>
    tpu.vector_store %arg4[%c0_6, %c0_7], %13 {strides = array<i32>} : memref<4x128xf32, #tpu.memory_space<vmem>>, vector<4x128xf32>,
    return
  }
  func.func @transform_0(%arg0: i32) -> (i32, i32) {
    %c0_i32 = arith.constant 0 : i32
    %c0_i32_0 = arith.constant 0 : i32
    %c0_i32_1 = arith.constant 0 : i32
    return %c0_i32, %c0_i32_0 : i32, i32
  }
  func.func @transform_1(%arg0: i32) -> (i32, i32) {
    %c0_i32 = arith.constant 0 : i32
    %c0_i32_0 = arith.constant 0 : i32
    %c0_i32_1 = arith.constant 0 : i32
    return %c0_i32, %c0_i32_0 : i32, i32
  }
  func.func @transform_2(%arg0: i32) -> (i32, i32) {
    %c0_i32 = arith.constant 0 : i32
    %c0_i32_0 = arith.constant 0 : i32
    return %arg0, %c0_i32 : i32, i32
  }
  func.func @transform_3(%arg0: i32) -> (i32, i32) {
    %c0_i32 = arith.constant 0 : i32
    %c0_i32_0 = arith.constant 0 : i32
    return %arg0, %c0_i32 : i32, i32
  }
}

</mosaic_0001>

<llo_original>
// kernel: tile.8
$region0: #{tile.8}
  #allocation0 [shape = 's32[1]{0}', space=sflag, size = 0x4, scoped, tag = 'scoped memory for tile.8']
  %s0 = inlined_call_operand.vmem [shape: f32[32], index: 0, kind: input, shape index: {}]
  %s1 = inlined_call_operand.vmem [shape: f32[4,32], index: 1, kind: output, shape index: {}]
  // Predicated region
  $region2: #{tile.8} parent=0 // pred_check
    _
  $region3: #{tile.8} parent=0 // pred_check_branch
    %3 = sbr.rel (0) target = $region5
  $region4: #{tile.8} parent=0 // pred_region
    _
  $region5: #{tile.8} parent=0 // pred_fallthru
    _
  %v4 = vld [vmem:[%s0] ss:$0 sm:$0xff]
  %5 = vst [vmem:[%s1] sm:$0xf] %v4

// kernel: tile.9
$region0: #{tile.9}
  %s0 = inlined_call_operand.vmem [shape: f32[4,32], index: 0, kind: input, shape index: {}]
  %s1 = inlined_call_operand.vmem [shape: f32[1,128], index: 1, kind: output, shape index: {}]
  $region1: #{tile.9} parent=0
    #allocation0 [shape = 'u8[4096]{0}', space=vmem, size = 0x1000, scoped, tag = 'scoped mem for output reshape']
    #allocation1 [shape = 'u8[4096]{0}', space=vmem, size = 0x1000, scoped, tag = 'scoped mem for input reshape']
    %s3 = ssub.s32 16, 1
    %v4 = vld [vmem:[%s0] sm:%s3]
    %5 = vst [vmem:[#allocation1] sm:%s3] %v4
    %v6 = vld [vmem:[#allocation1] sm:$0x1]
    %vm7 = vcmask 261120
    %8 = vst.msk [vmem:[#allocation0] sm:$0x1] %vm7, %v6
    %s9 = scalar_lea.vmem [#allocation1], 3
    %v10 = vld [vmem:[%s9] sm:$0x1]
    %11 = vrot.lane.b32.xlu0 %v10, 96
    %v12 = vpop.permute.xlu0 %11
    %vm13 = vcmask 1048320
    %14 = vst.msk [vmem:[#allocation0] sm:$0x1] %vm13, %v12
    %s15 = scalar_lea.vmem [#allocation1], 2
    %v16 = vld [vmem:[%s15] sm:$0x1]
    %17 = vrot.lane.b32.xlu0 %v16, 64
    %v18 = vpop.permute.xlu0 %17
    %vm19 = vcmask 785920
    %20 = vst.msk [vmem:[#allocation0] sm:$0x1] %vm19, %v18
    %s21 = scalar_lea.vmem [#allocation1], 1
    %v22 = vld [vmem:[%s21] sm:$0x1]
    %23 = vrot.lane.b32.xlu0 %v22, 32
    %v24 = vpop.permute.xlu0 %23
    %vm25 = vcmask 523520
    %26 = vst.msk [vmem:[#allocation0] sm:$0x1] %vm25, %v24
    %s28 = ssub.s32 2, 1
    %v29 = vld [vmem:[#allocation0] sm:%s28]
    %s31 = ssub.s32 2, 1
    %32 = vst [vmem:[%s1] sm:%s31] %v29

// kernel: _yarn_cos_sin_pallas.1
$region0: #{_yarn_cos_sin_pallas.1}
  #allocation0 [shape = 'u32[]', space=smem, size = 0x4, offset = 0x4, fixed_abs, tag = 'smem constant byte address 0x4 - core index']
  #allocation1 [shape = 'u32[72,128]{1,0:T(1,128)}', space=vmem, size = 0x9000, scoped, tag = 'internal scratch']
  %s0 = inlined_call_operand.vmem [shape: f32[4,128], index: 0, kind: input, shape index: {}]
  %s1 = inlined_call_operand.vmem [shape: f32[1,128], index: 1, kind: input, shape index: {}]
  %s2 = inlined_call_operand.vmem [shape: f32[4,128], index: 2, kind: output, shape index: {0}]
  %s3 = inlined_call_operand.vmem [shape: f32[4,128], index: 3, kind: output, shape index: {1}]
  %4 = xla_tuple %s2, %s3
  %s5 = sld [smem:[#allocation0]]
  $region26: #{_yarn_cos_sin_pallas.1} parent=0
    _
  %s7 = ssub.s32 1, %s5
  %s8 = scalar_select 0, %s7, %s5
  // Predicated region
  $region2: #{_yarn_cos_sin_pallas.1} parent=0 // pred_check
    _
  $region3: #{_yarn_cos_sin_pallas.1} parent=0 // pred_check_branch
    %10 = sbr.rel (0) target = $region5
  $region4: #{_yarn_cos_sin_pallas.1} parent=0 // pred_region
    _
  $region5: #{_yarn_cos_sin_pallas.1} parent=0 // pred_fallthru
    _
  // Predicated region
  $region6: #{_yarn_cos_sin_pallas.1} parent=0 // pred_check
    _
  $region7: #{_yarn_cos_sin_pallas.1} parent=0 // pred_check_branch
    %12 = sbr.rel (0) target = $region9
  $region8: #{_yarn_cos_sin_pallas.1} parent=0 // pred_region
    _
  $region9: #{_yarn_cos_sin_pallas.1} parent=0 // pred_fallthru
    _
  %s13 = smul.u32 0, 16
  %s14 = scvt.s32.f32 %s13
  %v15 = vld [vmem:[%s0] sm:$0xf]
  %v16 = vstv %s14
  %v17 = vadd.f32 %v15, %v16
  %v18 = vld [vmem:[%s1] sm:$0x1]
  %v20 = vperm.slane %v18, 0
  %v22 = vmul.f32 %v17, %v20
  %v23 = vand.u32 2147483647, %v22
  %vm24 = vcmp.le.f32.partialorder %v23, 0.7853982
  %vm25 = vcmp.lt.s32.totalorder %v22, 0
  %v26 = vand.u32 %v22, 2139095040
  %v27 = vshrl.u32 %v26, 23
  %v28 = vsub.s32 %v27, 127
  %v29 = vand.u32 2147483647, %v22
  %v30 = vand.u32 %v29, 8388607
  %v31 = vor.u32 %v30, 8388608
  %v32 = vsub.s32 0, %v31
  %v33 = vadd.s32 %v28, 1
  %vm34 = vcmp.gt.s32.totalorder %v33, 0
  %v35 = vsel %vm34, %v33, 0
  %v36 = vshrl.u32 %v35, 5
  %v37 = vand.u32 %v35, 31
  %v38 = vsub.s32 32, %v37
  %v39 = vshrl.u32 683565275, %v38
  %v40 = vshll.u32 683565275, %v37
  %v41 = vshrl.u32 2475754826, %v38
  %v42 = vor.u32 %v40, %v41
  %v43 = vshll.u32 2475754826, %v37
  %v44 = vshrl.u32 2131351028, %v38
  %v45 = vor.u32 %v43, %v44
  %v46 = vshll.u32 2131351028, %v37
  %v47 = vshrl.u32 2102212464, %v38
  %v48 = vor.u32 %v46, %v47
  %v49 = vshll.u32 2102212464, %v37
  %v50 = vshrl.u32 920167782, %v38
  %v51 = vor.u32 %v49, %v50
  %v52 = vshll.u32 920167782, %v37
  %v53 = vshrl.u32 1326507024, %v38
  %v54 = vor.u32 %v52, %v53
  %vm55 = vcmp.lt.s32.totalorder %v36, 1
  %vm56 = vcmp.lt.s32.totalorder %v36, 2
  %vm57 = vcmp.lt.s32.totalorder %v36, 3
  %vm58 = vcmp.lt.s32.totalorder %v36, 4
  %v59 = vsel %vm55, %v39, %v42
  %v60 = vsel %vm58, %v48, 2102212464
  %v61 = vsel %vm57, %v45, %v60
  %v62 = vsel %vm56, %v59, %v61
  %v63 = vsel %vm55, %v42, %v45
  %v64 = vsel %vm58, %v51, 920167782
  %v65 = vsel %vm57, %v48, %v64
  %v66 = vsel %vm56, %v63, %v65
  %v67 = vsel %vm55, %v45, %v48
  %v68 = vsel %vm58, %v54, 1326507024
  %v69 = vsel %vm57, %v51, %v68
  %v70 = vsel %vm56, %v67, %v69
  %v71 = vshll.u32 %v31, 8
  %v72 = vand.u32 %v71, 65535
  %v73 = vshrl.u32 %v71, 16
  %v74 = vand.u32 %v70, 65535
  %v75 = vshrl.u32 %v70, 16
  %v76 = vmul.u32 %v72, %v74
  %v77 = vmul.u32 %v72, %v75
  %v78 = vmul.u32 %v73, %v74
  %v79 = vmul.u32 %v73, %v75
  %v80 = vshll.u32 %v77, 16
  %v81 = vshrl.u32 %v77, 16
  %v82 = vshll.u32 %v78, 16
  %v83 = vshrl.u32 %v78, 16
  %vm84 = vc.u32 %v76, %v80
  %v85 = vsel %vm84, 1, 0
  %v86 = vadd.s32 %v76, %v80
  %v87 = vadd.s32 %v79, %v85
  %vm88 = vc.u32 %v86, %v82
  %v89 = vsel %vm88, 1, 0
  %v90 = vadd.s32 %v86, %v82
  %v91 = vadd.s32 %v87, %v89
  %v92 = vadd.s32 %v91, %v81
  %v93 = vadd.s32 %v92, %v83
  %v94 = vand.u32 %v71, 65535
  %v95 = vshrl.u32 %v71, 16
  %v96 = vand.u32 %v66, 65535
  %v97 = vshrl.u32 %v66, 16
  %v98 = vmul.u32 %v94, %v96
  %v99 = vmul.u32 %v94, %v97
  %v100 = vmul.u32 %v95, %v96
  %v101 = vmul.u32 %v95, %v97
  %v102 = vshll.u32 %v99, 16
  %v103 = vshrl.u32 %v99, 16
  %v104 = vshll.u32 %v100, 16
  %v105 = vshrl.u32 %v100, 16
  %vm106 = vc.u32 %v98, %v102
  %v107 = vsel %vm106, 1, 0
  %v108 = vadd.s32 %v98, %v102
  %v109 = vadd.s32 %v101, %v107
  %vm110 = vc.u32 %v108, %v104
  %v111 = vsel %vm110, 1, 0
  %v112 = vadd.s32 %v108, %v104
  %v113 = vadd.s32 %v109, %v111
  %v114 = vadd.s32 %v113, %v103
  %v115 = vadd.s32 %v114, %v105
  %v116 = vmul.u32 %v71, %v62
  %v117 = vadd.s32 %v93, %v112
  %vm118 = vc.u32 %v93, %v112
  %v119 = vadd.s32 %v115, 1
  %v120 = vsel %vm118, %v119, %v115
  %v121 = vadd.s32 %v116, %v120
  %v122 = vadd.s32 %v121, 536870912
  %v123 = vshrl.u32 %v122, 30
  %v124 = vshll.u32 %v123, 30
  %v125 = vsub.s32 %v121, %v124
  %vm126 = vcmp.lt.s32.totalorder %v125, 0
  %v127 = vsub.s32 0, %v125
  %v128 = vsel %vm126, %v127, %v125
  %v129 = vclz %v128
  %v130 = vsub.s32 %v129, 2
  %vm131 = vcmp.gt.s32.totalorder 0, %v130
  %v132 = vsel %vm131, 0, %v130
  %v133 = vsub.s32 32, %v132
  %v134 = vshll.u32 %v125, %v132
  %v135 = vshrl.u32 %v117, %v133
  %v136 = vor.u32 %v134, %v135
  %v137 = vsub.s32 4294967266, %v132
  %v138 = vadd.s32 %v137, 127
  %v139 = vshll.u32 %v138, 23
  %v140 = vor.u32 4788187, %v139
  %v141 = vand.u32 2147483647, %v140
  %v143 = vcvt.s32.f32 %v136
  %v144 = vmul.f32 %v143, %v141
  %v145 = vxor.u32 %v144, 2147483648
  %v146 = vsel %vm25, %v145, %v144
  %v147 = vsub.s32 4, %v123
  %v148 = vsel %vm25, %v147, %v123
  %v149 = vsel %vm24, %v22, %v146
  %v150 = vsel %vm24, 0, %v148
  %v151 = vmul.f32 %v149, %v149
  %v152 = vmul.f32 %v151, -0.001358992
  %v153 = vadd.f32 %v152, 0.041655596
  %v154 = vmul.f32 %v151, %v153
  %v155 = vadd.f32 %v154, -0.4999988
  %v156 = vmul.f32 %v151, %v155
  %v157 = vadd.f32 1.0, %v156
  %v158 = vmul.f32 %v149, %v149
  %v159 = vmul.f32 %v158, -0.00019511016
  %v160 = vadd.f32 %v159, 0.008332121
  %v161 = vmul.f32 %v158, %v160
  %v162 = vadd.f32 %v161, -0.16666654
  %v163 = vmul.f32 %v158, %v162
  %v164 = vadd.f32 %v163, 1.0
  %v165 = vmul.f32 %v164, %v149
  %vm166 = vweird.f32 %v22
  %v167 = vand.u32 %v150, 3
  %vm168 = vcmp.lt.s32.totalorder %v167, 2
  %vm169 = vcmp.eq.s32.totalorder %v167, 0
  %v170 = vxor.u32 %v165, 2147483648
  %v171 = vsel %vm169, %v157, %v170
  %vm172 = vcmp.eq.s32.totalorder %v167, 2
  %v173 = vxor.u32 %v157, 2147483648
  %v174 = vsel %vm172, %v173, %v165
  %v175 = vsel %vm168, %v171, %v174
  %v176 = vsel %vm166, nan, %v175
  %v177 = vand.u32 2147483647, %v22
  %vm178 = vcmp.le.f32.partialorder %v177, 0.7853982
  %vm179 = vcmp.lt.s32.totalorder %v22, 0
  %v180 = vand.u32 %v22, 2139095040
  %v181 = vshrl.u32 %v180, 23
  %v182 = vsub.s32 %v181, 127
  %v183 = vand.u32 2147483647, %v22
  %v184 = vand.u32 %v183, 8388607
  %v185 = vor.u32 %v184, 8388608
  %v186 = vsub.s32 0, %v185
  %v187 = vadd.s32 %v182, 1
  %vm188 = vcmp.gt.s32.totalorder %v187, 0
  %v189 = vsel %vm188, %v187, 0
  %v190 = vshrl.u32 %v189, 5
  %v191 = vand.u32 %v189, 31
  %v192 = vsub.s32 32, %v191
  %v193 = vshrl.u32 683565275, %v192
  %v194 = vshll.u32 683565275, %v191
  %v195 = vshrl.u32 2475754826, %v192
  %v196 = vor.u32 %v194, %v195
  %v197 = vshll.u32 2475754826, %v191
  %v198 = vshrl.u32 2131351028, %v192
  %v199 = vor.u32 %v197, %v198
  %v200 = vshll.u32 2131351028, %v191
  %v201 = vshrl.u32 2102212464, %v192
  %v202 = vor.u32 %v200, %v201
  %v203 = vshll.u32 2102212464, %v191
  %v204 = vshrl.u32 920167782, %v192
  %v205 = vor.u32 %v203, %v204
  %v206 = vshll.u32 920167782, %v191
  %v207 = vshrl.u32 1326507024, %v192
  %v208 = vor.u32 %v206, %v207
  %vm209 = vcmp.lt.s32.totalorder %v190, 1
  %vm210 = vcmp.lt.s32.totalorder %v190, 2
  %vm211 = vcmp.lt.s32.totalorder %v190, 3
  %vm212 = vcmp.lt.s32.totalorder %v190, 4
  %v213 = vsel %vm209, %v193, %v196
  %v214 = vsel %vm212, %v202, 2102212464
  %v215 = vsel %vm211, %v199, %v214
  %v216 = vsel %vm210, %v213, %v215
  %v217 = vsel %vm209, %v196, %v199
  %v218 = vsel %vm212, %v205, 920167782
  %v219 = vsel %vm211, %v202, %v218
  %v220 = vsel %vm210, %v217, %v219
  %v221 = vsel %vm209, %v199, %v202
  %v222 = vsel %vm212, %v208, 1326507024
  %v223 = vsel %vm211, %v205, %v222
  %v224 = vsel %vm210, %v221, %v223
  %v225 = vshll.u32 %v185, 8
  %v226 = vand.u32 %v225, 65535
  %v227 = vshrl.u32 %v225, 16
  %v228 = vand.u32 %v224, 65535
  %v229 = vshrl.u32 %v224, 16
  %v230 = vmul.u32 %v226, %v228
  %v231 = vmul.u32 %v226, %v229
  %v232 = vmul.u32 %v227, %v228
  %v233 = vmul.u32 %v227, %v229
  %v234 = vshll.u32 %v231, 16
  %v235 = vshrl.u32 %v231, 16
  %v236 = vshll.u32 %v232, 16
  %v237 = vshrl.u32 %v232, 16
  %vm238 = vc.u32 %v230, %v234
  %v239 = vsel %vm238, 1, 0
  %v240 = vadd.s32 %v230, %v234
  %v241 = vadd.s32 %v233, %v239
  %vm242 = vc.u32 %v240, %v236
  %v243 = vsel %vm242, 1, 0
  %v244 = vadd.s32 %v240, %v236
  %v245 = vadd.s32 %v241, %v243
  %v246 = vadd.s32 %v245, %v235
  %v247 = vadd.s32 %v246, %v237
  %v248 = vand.u32 %v225, 65535
  %v249 = vshrl.u32 %v225, 16
  %v250 = vand.u32 %v220, 65535
  %v251 = vshrl.u32 %v220, 16
  %v252 = vmul.u32 %v248, %v250
  %v253 = vmul.u32 %v248, %v251
  %v254 = vmul.u32 %v249, %v250
  %v255 = vmul.u32 %v249, %v251
  %v256 = vshll.u32 %v253, 16
  %v257 = vshrl.u32 %v253, 16
  %v258 = vshll.u32 %v254, 16
  %v259 = vshrl.u32 %v254, 16
  %vm260 = vc.u32 %v252, %v256
  %v261 = vsel %vm260, 1, 0
  %v262 = vadd.s32 %v252, %v256
  %v263 = vadd.s32 %v255, %v261
  %vm264 = vc.u32 %v262, %v258
  %v265 = vsel %vm264, 1, 0
  %v266 = vadd.s32 %v262, %v258
  %v267 = vadd.s32 %v263, %v265
  %v268 = vadd.s32 %v267, %v257
  %v269 = vadd.s32 %v268, %v259
  %v270 = vmul.u32 %v225, %v216
  %v271 = vadd.s32 %v247, %v266
  %vm272 = vc.u32 %v247, %v266
  %v273 = vadd.s32 %v269, 1
  %v274 = vsel %vm272, %v273, %v269
  %v275 = vadd.s32 %v270, %v274
  %v276 = vadd.s32 %v275, 536870912
  %v277 = vshrl.u32 %v276, 30
  %v278 = vshll.u32 %v277, 30
  %v279 = vsub.s32 %v275, %v278
  %vm280 = vcmp.lt.s32.totalorder %v279, 0
  %v281 = vsub.s32 0, %v279
  %v282 = vsel %vm280, %v281, %v279
  %v283 = vclz %v282
  %v284 = vsub.s32 %v283, 2
  %vm285 = vcmp.gt.s32.totalorder 0, %v284
  %v286 = vsel %vm285, 0, %v284
  %v287 = vsub.s32 32, %v286
  %v288 = vshll.u32 %v279, %v286
  %v289 = vshrl.u32 %v271, %v287
  %v290 = vor.u32 %v288, %v289
  %v291 = vsub.s32 4294967266, %v286
  %v292 = vadd.s32 %v291, 127
  %v293 = vshll.u32 %v292, 23
  %v294 = vor.u32 4788187, %v293
  %v295 = vand.u32 2147483647, %v294
  %v297 = vcvt.s32.f32 %v290
  %v298 = vmul.f32 %v297, %v295
  %v299 = vxor.u32 %v298, 2147483648
  %v300 = vsel %vm179, %v299, %v298
  %v301 = vsub.s32 4, %v277
  %v302 = vsel %vm179, %v301, %v277
  %v303 = vsel %vm178, %v22, %v300
  %v304 = vsel %vm178, 0, %v302
  %v305 = vmul.f32 %v303, %v303
  %v306 = vmul.f32 %v305, -0.001358992
  %v307 = vadd.f32 %v306, 0.041655596
  %v308 = vmul.f32 %v305, %v307
  %v309 = vadd.f32 %v308, -0.4999988
  %v310 = vmul.f32 %v305, %v309
  %v311 = vadd.f32 1.0, %v310
  %v312 = vmul.f32 %v303, %v303
  %v313 = vmul.f32 %v312, -0.00019511016
  %v314 = vadd.f32 %v313, 0.008332121
  %v315 = vmul.f32 %v312, %v314
  %v316 = vadd.f32 %v315, -0.16666654
  %v317 = vmul.f32 %v312, %v316
  %v318 = vadd.f32 %v317, 1.0
  %v319 = vmul.f32 %v318, %v303
  %vm320 = vweird.f32 %v22
  %v321 = vadd.s32 %v304, 3
  %v322 = vand.u32 %v321, 3
  %vm323 = vcmp.lt.s32.totalorder %v322, 2
  %vm324 = vcmp.eq.s32.totalorder %v322, 0
  %v325 = vxor.u32 %v319, 2147483648
  %v326 = vsel %vm324, %v311, %v325
  %vm327 = vcmp.eq.s32.totalorder %v322, 2
  %v328 = vxor.u32 %v311, 2147483648
  %v329 = vsel %vm327, %v328, %v319
  %v330 = vsel %vm323, %v326, %v329
  %v331 = vsel %vm320, nan, %v330
  %v332 = vmul.f32 %v176, 1.0693147
  %v333 = vmul.f32 %v331, 1.0693147
  %334 = vst [vmem:[%s2] sm:$0xf] %v332
  %335 = vst [vmem:[%s3] sm:$0xf] %v333
  // Predicated region
  $region10: #{_yarn_cos_sin_pallas.1} parent=0 // pred_check
    _
  $region11: #{_yarn_cos_sin_pallas.1} parent=0 // pred_check_branch
    %337 = sbr.rel (0) target = $region13
  $region12: #{_yarn_cos_sin_pallas.1} parent=0 // pred_region
    _
  $region13: #{_yarn_cos_sin_pallas.1} parent=0 // pred_fallthru
    _
  // Predicated region
  $region14: #{_yarn_cos_sin_pallas.1} parent=0 // pred_check
    _
  $region15: #{_yarn_cos_sin_pallas.1} parent=0 // pred_check_branch
    %339 = sbr.rel (0) target = $region17
  $region16: #{_yarn_cos_sin_pallas.1} parent=0 // pred_region
    _
  $region17: #{_yarn_cos_sin_pallas.1} parent=0 // pred_fallthru
    _
  // Predicated region
  $region18: #{_yarn_cos_sin_pallas.1} parent=0 // pred_check
    _
  $region19: #{_yarn_cos_sin_pallas.1} parent=0 // pred_check_branch
    %341 = sbr.rel (0) target = $region21
  $region20: #{_yarn_cos_sin_pallas.1} parent=0 // pred_region
    _
  $region21: #{_yarn_cos_sin_pallas.1} parent=0 // pred_fallthru
    _
  // Predicated region
  $region22: #{_yarn_cos_sin_pallas.1} parent=0 // pred_check
    _
  $region23: #{_yarn_cos_sin_pallas.1} parent=0 // pred_check_branch
    %343 = sbr.rel (0) target = $region25
  $region24: #{_yarn_cos_sin_pallas.1} parent=0 // pred_region
    _
  $region25: #{_yarn_cos_sin_pallas.1} parent=0 // pred_fallthru
    _

</llo_original>
